<compile_context>
chip_gen: v5e
topology: v5e:2x2
jax: 0.10.0
libtpu: 0.0.40
codegen_flags: <defaults>
</compile_context>

<pallas_src>
import functools

import jax
import jax.numpy as jnp
from jax.experimental import pallas as pl
from jax.experimental.pallas import tpu as pltpu

EPS = 1e-5
_MIB = 1024 * 1024


def _withbias_ln_kernel(x_ref, w_ref, b_ref, o_ref):
    # x_ref: (C, TILE_S). Normalize each spatial column over C (sublane axis).
    x = x_ref[...].astype(jnp.float32)
    mu = jnp.mean(x, axis=0, keepdims=True)             # (1, TILE_S)
    xc = x - mu
    var = jnp.mean(xc * xc, axis=0, keepdims=True)      # unbiased=False
    inv = jax.lax.rsqrt(var + EPS)                      # EUP slot (free here)
    w = w_ref[...].astype(jnp.float32)                  # (C, 1) lane-broadcast
    b = b_ref[...].astype(jnp.float32)                  # (C, 1)
    o_ref[...] = (xc * inv * w + b).astype(o_ref.dtype)


def _biasfree_ln_kernel(x_ref, w_ref, o_ref):
    # BiasFree: sigma is the mean-subtracted variance, but x itself is NOT
    # centered:  out = x / sqrt(var + eps) * weight
    # (Kept in the centered/numerically-safe form per the review.)
    x = x_ref[...].astype(jnp.float32)
    mu = jnp.mean(x, axis=0, keepdims=True)
    xc = x - mu
    var = jnp.mean(xc * xc, axis=0, keepdims=True)
    inv = jax.lax.rsqrt(var + EPS)
    w = w_ref[...].astype(jnp.float32)
    o_ref[...] = (x * inv * w).astype(o_ref.dtype)


def _vmem_budget():
    """(vmem_limit_bytes, live_block_budget_bytes) for this generation."""
    try:
        info = pltpu.get_tpu_info()
        cap = int(getattr(info, "vmem_capacity_bytes", 64 * _MIB))
    except Exception:
        cap = 64 * _MIB                      # conservative fallback (v7x per-TC)
    # ~50-75% of physical capacity; capped so v5e/v6e (128 MiB) stay sane and
    # v7x (64 MiB) ends up around 48 MiB.
    vmem_limit = min((3 * cap) // 4, 64 * _MIB)
    # Live blocks (2 in + 2 out buffers + f32 temps) get the limit minus
    # headroom for compiler-internal scratch.
    block_budget = max(vmem_limit - 8 * _MIB, 8 * _MIB)
    return vmem_limit, block_budget


def _choose_tile_s(s, c, itemsize, max_tile_s, block_budget, batch):
    """Lane tile for the spatial axis.

    * multiple of 128 (or the full extent when S <= 128),
    * sized so (2 in + 2 out buffers at I/O dtype + ~2 block-sized f32 temps)
      fits the VMEM block budget,
    * balanced across tiles (no sliver last tile),
    * and chosen so the total grid has >= ~4 steps when S permits
      (keeps both v7x TensorCores busy and the DMA pipeline overlapped).
    """
    if s <= 128:
        return s                                   # single full-extent block

    # Bytes of VMEM needed per lane of tile: 2x input + 2x output pipeline
    # buffers at the I/O dtype plus ~2 block-sized f32 temporaries.
    per_lane = c * (4 * itemsize + 2 * 4)
    budget_ts = max((block_budget // per_lane) // 128 * 128, 128)
    ts_cap = max(min(max_tile_s, budget_ts), 128)

    # Want at least ~4 total grid steps (batch * spatial tiles) when possible.
    min_spatial_tiles = max(1, -(-4 // max(batch, 1)))        # ceil(4 / B)
    n = max(pl.cdiv(s, ts_cap), min_spatial_tiles)
    n = min(n, pl.cdiv(s, 128))                   # never below 128-lane tiles
    n = max(n, 1)

    # Balanced tile: round up to a multiple of 128.
    ts = ((pl.cdiv(s, n) + 127) // 128) * 128
    return ts


def _layernorm_bcs(x3, weight, bias, layernorm_type, max_tile_s):
    """x3: (B, C, S) with S = H*W. Returns (B, C, S)."""
    b, c, s = x3.shape
    vmem_limit, block_budget = _vmem_budget()
    ts = _choose_tile_s(s, c, x3.dtype.itemsize, max_tile_s, block_budget, b)
    grid = (b, pl.cdiv(s, ts))                    # partial last tile is OK

    # Batch dim squeezed out of the kernel view; C on sublanes, spatial on lanes.
    x_spec = pl.BlockSpec((None, c, ts), lambda bi, si: (bi, 0, si))
    o_spec = pl.BlockSpec((None, c, ts), lambda bi, si: (bi, 0, si))
    # Weight / bias blocks are resident across the whole grid (constant index).
    p_spec = pl.BlockSpec((c, 1), lambda bi, si: (0, 0))

    w2 = weight.reshape(c, 1)
    params = pltpu.CompilerParams(
        dimension_semantics=("parallel", "parallel"),
        vmem_limit_bytes=vmem_limit)

    if layernorm_type == "BiasFree":
        return pl.pallas_call(
            _biasfree_ln_kernel,
            out_shape=jax.ShapeDtypeStruct((b, c, s), x3.dtype),
            grid=grid,
            in_specs=[x_spec, p_spec],
            out_specs=o_spec,
            compiler_params=params,
        )(x3, w2)
    else:
        b2 = bias.reshape(c, 1)
        return pl.pallas_call(
            _withbias_ln_kernel,
            out_shape=jax.ShapeDtypeStruct((b, c, s), x3.dtype),
            grid=grid,
            in_specs=[x_spec, p_spec, p_spec],
            out_specs=o_spec,
            compiler_params=params,
        )(x3, w2, b2)


@functools.partial(jax.jit, static_argnames=("layernorm_type", "max_tile_s"))
def layernorm_nchw(x, weight, bias, layernorm_type="WithBias", max_tile_s=8192):
    """Full LayerNorm module forward.

    x: (B, C, H, W)  (PyTorch NCHW convention), any float dtype (bf16 I/O
       halves HBM traffic on v5e/v6e; math is always f32 inside the kernel).
    weight: (C,), bias: (C,)  (bias ignored for BiasFree)
    """
    b, c, h, w = x.shape
    x3 = x.reshape(b, c, h * w)       # free reshape: no transpose, no HBM copy
    y3 = _layernorm_bcs(x3, weight, bias, layernorm_type, max_tile_s)
    return y3.reshape(b, c, h, w)


# ----------------------- pure-JAX references -----------------------

def _reference_withbias(x, weight, bias):
    x3d = jnp.transpose(x, (0, 2, 3, 1)).astype(jnp.float32)
    mu = jnp.mean(x3d, axis=-1, keepdims=True)
    var = jnp.var(x3d, axis=-1, keepdims=True)
    y = (x3d - mu) / jnp.sqrt(var + EPS) * weight.astype(jnp.float32) \
        + bias.astype(jnp.float32)
    return jnp.transpose(y, (0, 3, 1, 2)).astype(x.dtype)


def _reference_biasfree(x, weight):
    x3d = jnp.transpose(x, (0, 2, 3, 1)).astype(jnp.float32)
    var = jnp.var(x3d, axis=-1, keepdims=True)
    y = x3d / jnp.sqrt(var + EPS) * weight.astype(jnp.float32)
    return jnp.transpose(y, (0, 3, 1, 2)).astype(x.dtype)


if __name__ == "__main__":
    key = jax.random.PRNGKey(0)
    B, C, H, W = 2, 4, 16, 16        # small NCHW input, S = H*W = 256

    x = jax.random.normal(key, (B, C, H, W), dtype=jnp.float32)
    weight = jnp.linspace(0.5, 1.5, C, dtype=jnp.float32)
    bias = jnp.linspace(-0.1, 0.1, C, dtype=jnp.float32)

    # WithBias, f32 (budget-driven tiles; at this size grid = (2, 2)).
    out_wb = layernorm_nchw(x, weight, bias, layernorm_type="WithBias")
    jax.block_until_ready(out_wb)
    ref_wb = _reference_withbias(x, weight, bias)
    assert out_wb.shape == (B, C, H, W)
    assert jnp.allclose(out_wb, ref_wb, atol=1e-5, rtol=1e-5), "WithBias mismatch"

    # BiasFree variant.
    out_bf = layernorm_nchw(x, weight, bias, layernorm_type="BiasFree")
    jax.block_until_ready(out_bf)
    ref_bf = _reference_biasfree(x, weight)
    assert jnp.allclose(out_bf, ref_bf, atol=1e-5, rtol=1e-5), "BiasFree mismatch"

    # Non-divisible spatial extent with B=1: S = 18*18 = 324 -> balanced
    # 128-lane tiles, grid (1, 3): exercises cdiv + masked partial writeback
    # AND the >=2-spatial-tile guarantee for the single-image case.
    x2 = jax.random.normal(jax.random.PRNGKey(1), (1, C, 18, 18),
                           dtype=jnp.float32)
    out_p = layernorm_nchw(x2, weight, bias, layernorm_type="WithBias")
    jax.block_until_ready(out_p)
    ref_p = _reference_withbias(x2, weight, bias)
    assert jnp.allclose(out_p, ref_p, atol=1e-5, rtol=1e-5), "partial-tile mismatch"

    # bf16 I/O path (halves HBM traffic; math stays f32 inside the kernel).
    x_bf = x.astype(jnp.bfloat16)
    out_b16 = layernorm_nchw(x_bf, weight, bias, layernorm_type="WithBias")
    jax.block_until_ready(out_b16)
    ref_b16 = _reference_withbias(x_bf, weight, bias)
    assert out_b16.dtype == jnp.bfloat16
    assert jnp.allclose(out_b16.astype(jnp.float32),
                        ref_b16.astype(jnp.float32),
                        atol=2e-2, rtol=2e-2), "bf16 mismatch"

    print("KERNEL_OK")
</pallas_src>

<mosaic_0001>
module attributes {stable_mosaic.version = 11 : i64} {
  func.func @_withbias_ln_kernel(%arg0: i32, %arg1: i32, %arg2: memref<1x4x128xf32, #tpu.memory_space<vmem>>, %arg3: memref<4x1xf32, #tpu.memory_space<vmem>>, %arg4: memref<4x1xf32, #tpu.memory_space<vmem>>, %arg5: memref<1x4x128xf32, #tpu.memory_space<vmem>>) attributes {dimension_semantics = [#tpu.dimension_semantics<parallel>, #tpu.dimension_semantics<parallel>], iteration_bounds = array<i64: 2, 2>, scalar_prefetch = 0 : i64, scratch_operands = 0 : i64, tpu.core_type = #tpu.core_type<tc>, window_params = [{transform_indices = @transform_0, window_bounds = array<i64: 1, 4, 128>}, {pipeline_mode = #tpu.pipeline_mode<synchronous>, transform_indices = @transform_1, window_bounds = array<i64: 4, 1>}, {pipeline_mode = #tpu.pipeline_mode<synchronous>, transform_indices = @transform_2, window_bounds = array<i64: 4, 1>}, {transform_indices = @transform_3, window_bounds = array<i64: 1, 4, 128>}]} {
    %c0 = arith.constant 0 : index
    %c0_0 = arith.constant 0 : index
    %c0_1 = arith.constant 0 : index
    %0 = vector.load %arg2[%c0, %c0_0, %c0_1] : memref<1x4x128xf32, #tpu.memory_space<vmem>>, vector<1x4x128xf32>
    %1 = vector.shape_cast %0 : vector<1x4x128xf32> to vector<4x128xf32>
    %cst = arith.constant dense<0.000000e+00> : vector<128xf32>
    %2 = vector.multi_reduction <add>, %1, %cst [0] : vector<4x128xf32> to vector<128xf32>
    %3 = vector.shape_cast %2 : vector<128xf32> to vector<1x128xf32>
    %cst_2 = arith.constant 4.000000e+00 : f32
    %4 = vector.broadcast %cst_2 : f32 to vector<1x128xf32>
    %5 = arith.divf %3, %4 : vector<1x128xf32>
    %6 = vector.broadcast %5 : vector<1x128xf32> to vector<4x128xf32>
    %7 = arith.subf %1, %6 : vector<4x128xf32>
    %8 = arith.mulf %7, %7 : vector<4x128xf32>
    %cst_3 = arith.constant dense<0.000000e+00> : vector<128xf32>
    %9 = vector.multi_reduction <add>, %8, %cst_3 [0] : vector<4x128xf32> to vector<128xf32>
    %10 = vector.shape_cast %9 : vector<128xf32> to vector<1x128xf32>
    %cst_4 = arith.constant 4.000000e+00 : f32
    %11 = vector.broadcast %cst_4 : f32 to vector<1x128xf32>
    %12 = arith.divf %10, %11 : vector<1x128xf32>
    %cst_5 = arith.constant 9.99999974E-6 : f32
    %13 = vector.broadcast %cst_5 : f32 to vector<1x128xf32>
    %14 = arith.addf %12, %13 : vector<1x128xf32>
    %15 = math.rsqrt %14 : vector<1x128xf32>
    %c0_6 = arith.constant 0 : index
    %c0_7 = arith.constant 0 : index
    %16 = vector.load %arg3[%c0_6, %c0_7] : memref<4x1xf32, #tpu.memory_space<vmem>>, vector<4x1xf32>
    %c0_8 = arith.constant 0 : index
    %c0_9 = arith.constant 0 : index
    %17 = vector.load %arg4[%c0_8, %c0_9] : memref<4x1xf32, #tpu.memory_space<vmem>>, vector<4x1xf32>
    %18 = vector.broadcast %15 : vector<1x128xf32> to vector<4x128xf32>
    %19 = arith.mulf %7, %18 : vector<4x128xf32>
    %20 = vector.broadcast %16 : vector<4x1xf32> to vector<4x128xf32>
    %21 = arith.mulf %19, %20 : vector<4x128xf32>
    %22 = vector.broadcast %17 : vector<4x1xf32> to vector<4x128xf32>
    %23 = arith.addf %21, %22 : vector<4x128xf32>
    %c0_10 = arith.constant 0 : index
    %c0_11 = arith.constant 0 : index
    %c0_12 = arith.constant 0 : index
    %24 = vector.load %arg5[%c0_10, %c0_11, %c0_12] : memref<1x4x128xf32, #tpu.memory_space<vmem>>, vector<1x4x128xf32>
    %25 = vector.shape_cast %24 : vector<1x4x128xf32> to vector<4x128xf32>
    %26 = vector.shape_cast %23 : vector<4x128xf32> to vector<1x4x128xf32>
    tpu.vector_store %arg5[%c0_10, %c0_11, %c0_12], %26 {strides = array<i32>} : memref<1x4x128xf32, #tpu.memory_space<vmem>>, vector<1x4x128xf32>,
    return
  }
  func.func @transform_0(%arg0: i32, %arg1: i32) -> (i32, i32, i32) {
    %c0_i32 = arith.constant 0 : i32
    %c0_i32_0 = arith.constant 0 : i32
    return %arg0, %c0_i32, %arg1 : i32, i32, i32
  }
  func.func @transform_1(%arg0: i32, %arg1: i32) -> (i32, i32) {
    %c0_i32 = arith.constant 0 : i32
    %c0_i32_0 = arith.constant 0 : i32
    %c0_i32_1 = arith.constant 0 : i32
    return %c0_i32, %c0_i32_0 : i32, i32
  }
  func.func @transform_2(%arg0: i32, %arg1: i32) -> (i32, i32) {
    %c0_i32 = arith.constant 0 : i32
    %c0_i32_0 = arith.constant 0 : i32
    %c0_i32_1 = arith.constant 0 : i32
    return %c0_i32, %c0_i32_0 : i32, i32
  }
  func.func @transform_3(%arg0: i32, %arg1: i32) -> (i32, i32, i32) {
    %c0_i32 = arith.constant 0 : i32
    %c0_i32_0 = arith.constant 0 : i32
    return %arg0, %c0_i32, %arg1 : i32, i32, i32
  }
}

</mosaic_0001>

<llo_original>
// kernel: layernorm_nchw.1
$region0: #{layernorm_nchw.1}
  #allocation0 [shape = 'u32[]', space=smem, size = 0x4, offset = 0x4, fixed_abs, tag = 'smem constant byte address 0x4 - core index']
  #allocation1 [shape = 'u32[72,128]{1,0:T(1,128)}', space=vmem, size = 0x9000, scoped, tag = 'internal scratch']
  %s0 = inlined_call_operand.vmem [shape: f32[2,4,256], index: 0, kind: input, shape index: {}]
  %s1 = inlined_call_operand.vmem [shape: f32[4,1], index: 1, kind: input, shape index: {}]
  %s2 = inlined_call_operand.vmem [shape: f32[4,1], index: 2, kind: input, shape index: {}]
  %s3 = inlined_call_operand.vmem [shape: f32[2,4,256], index: 3, kind: output, shape index: {}]
  %s4 = sld [smem:[#allocation0]]
  $region45: #{layernorm_nchw.1} parent=0
    _
  %s6 = ssub.s32 1, %s4
  %s7 = scalar_select 0, %s6, %s4
  loop: start=0, step=1, limit=6
  $region2: #{layernorm_nchw.1} parent=0 // loop_pre_header
    _
  $region3: #{layernorm_nchw.1} parent=0 // loop_header
    %s9 = sphi 0, %s13
    %p10 = scmp.ge.s32.totalorder %s9, 6
    %s16 = sphi 0, %s28
    %s17 = sphi 0, %s24
    %s18 = sphi 0, %s16
    %s19 = sphi 0, %s17
    %s20 = sphi 0, %s18
    %s21 = sphi 0, %s19
    %s33 = sphi 0, %s35
    %s36 = sphi 0, %s33
    %s37 = sphi 0, %s36
    %s53 = sphi 0, %s37
    %s57 = sphi 0, %s57
    %s59 = sphi 0, %s57
    %s60 = sphi 0, %s59
    %s74 = sphi 0, %s60
    %s78 = sphi 0, %s78
    %s80 = sphi 0, %s78
    %s81 = sphi 0, %s80
    %s95 = sphi 0, %s81
    %s103 = sphi 0, %s105
    %s106 = sphi 0, %s103
    %s107 = sphi 0, %s106
    %s123 = sphi 0, %s107
  $region4: #{layernorm_nchw.1} parent=0 // loop_header_branch
    %12 = sbr.rel (%p10) target = $region8
  $region5: #{layernorm_nchw.1} parent=0 // loop_body
    %s14 = ssub.s32 %s9, 1
    %s15 = ssub.s32 %s9, 2
    %s22 = sadd.s32 1, %s17
    %p23 = scmp.ge.s32.totalorder %s22, 2
    %s24 = scalar_select %p23, 0, %s22
    %s25 = sadd.s32 1, %s16
    %s26 = scalar_select %p23, %s25, %s16
    %p27 = scmp.ge.s32.totalorder %s26, 2
    %s28 = scalar_select %p27, 0, %s26
    %s29 = ssub.s32 %s16, %s28
    %s30 = ssub.s32 %s17, %s24
    %s31 = sor.u32 %s29, %s30
    %p32 = scmp.eq.s32.totalorder %s31, 0
    %s34 = sadd.s32 %s33, 1
    %s35 = scalar_select %p32, %s33, %s34
    %p38 = pneg %p32
    %p39 = scmp.eq.s32.totalorder %s9, 3
    %p40 = por %p38, %p39
    %p41 = scmp.ne.s32.totalorder %s33, %s36
    %p42 = scmp.eq.s32.totalorder %s9, 0
    %p43 = por %p41, %p42
    %p44 = scmp.ne.s32.totalorder %s33, %s36
    %p45 = scmp.eq.s32.totalorder %s14, 3
    %p46 = por %p44, %p45
    %p47 = scmp.ne.s32.totalorder %s36, %s37
    %p48 = scmp.eq.s32.totalorder %s14, 0
    %p49 = por %p47, %p48
    %p50 = scmp.ne.s32.totalorder %s36, %s37
    %p51 = scmp.eq.s32.totalorder %s15, 3
    %p52 = por %p50, %p51
    %p54 = scmp.ne.s32.totalorder %s37, %s53
    %p55 = scmp.eq.s32.totalorder %s15, 0
    %p56 = por %p54, %p55
    %s58 = sadd.s32 %s57, 1
    %p61 = scmp.eq.s32.totalorder %s9, 3
    %p62 = scmp.ne.s32.totalorder %s57, %s59
    %p63 = scmp.eq.s32.totalorder %s9, 0
    %p64 = por %p62, %p63
    %p65 = scmp.ne.s32.totalorder %s57, %s59
    %p66 = scmp.eq.s32.totalorder %s14, 3
    %p67 = por %p65, %p66
    %p68 = scmp.ne.s32.totalorder %s59, %s60
    %p69 = scmp.eq.s32.totalorder %s14, 0
    %p70 = por %p68, %p69
    %p71 = scmp.ne.s32.totalorder %s59, %s60
    %p72 = scmp.eq.s32.totalorder %s15, 3
    %p73 = por %p71, %p72
    %p75 = scmp.ne.s32.totalorder %s60, %s74
    %p76 = scmp.eq.s32.totalorder %s15, 0
    %p77 = por %p75, %p76
    %s79 = sadd.s32 %s78, 1
    %p82 = scmp.eq.s32.totalorder %s9, 3
    %p83 = scmp.ne.s32.totalorder %s78, %s80
    %p84 = scmp.eq.s32.totalorder %s9, 0
    %p85 = por %p83, %p84
    %p86 = scmp.ne.s32.totalorder %s78, %s80
    %p87 = scmp.eq.s32.totalorder %s14, 3
    %p88 = por %p86, %p87
    %p89 = scmp.ne.s32.totalorder %s80, %s81
    %p90 = scmp.eq.s32.totalorder %s14, 0
    %p91 = por %p89, %p90
    %p92 = scmp.ne.s32.totalorder %s80, %s81
    %p93 = scmp.eq.s32.totalorder %s15, 3
    %p94 = por %p92, %p93
    %p96 = scmp.ne.s32.totalorder %s81, %s95
    %p97 = scmp.eq.s32.totalorder %s15, 0
    %p98 = por %p96, %p97
    %s99 = ssub.s32 %s16, %s28
    %s100 = ssub.s32 %s17, %s24
    %s101 = sor.u32 %s99, %s100
    %p102 = scmp.eq.s32.totalorder %s101, 0
    %s104 = sadd.s32 %s103, 1
    %s105 = scalar_select %p102, %s103, %s104
    %p108 = pneg %p102
    %p109 = scmp.eq.s32.totalorder %s9, 3
    %p110 = por %p108, %p109
    %p111 = scmp.ne.s32.totalorder %s103, %s106
    %p112 = scmp.eq.s32.totalorder %s9, 0
    %p113 = por %p111, %p112
    %p114 = scmp.ne.s32.totalorder %s103, %s106
    %p115 = scmp.eq.s32.totalorder %s14, 3
    %p116 = por %p114, %p115
    %p117 = scmp.ne.s32.totalorder %s106, %s107
    %p118 = scmp.eq.s32.totalorder %s14, 0
    %p119 = por %p117, %p118
    %p120 = scmp.ne.s32.totalorder %s106, %s107
    %p121 = scmp.eq.s32.totalorder %s15, 3
    %p122 = por %p120, %p121
    %p124 = scmp.ne.s32.totalorder %s107, %s123
    %p125 = scmp.eq.s32.totalorder %s15, 0
    %p126 = por %p124, %p125
    %p127 = scmp.le.s32.totalorder 1, %s9
    %p128 = scmp.lt.s32.totalorder %s9, 5
    %p129 = pnand %p127, %p128
    %p130 = pneg %p129
    // Predicated region
    $region9: #{layernorm_nchw.1} parent=5 // pred_check
      _
    $region10: #{layernorm_nchw.1} parent=5 // pred_check_branch
      %132 = sbr.rel (%p129) target = $region12
    $region11: #{layernorm_nchw.1} parent=5 // pred_region
      %s133 = ssub.s32 %s9, 1
      // Predicated region
      $region13: #{layernorm_nchw.1} parent=11 // pred_check
        %p134 = pneg %p70
      $region14: #{layernorm_nchw.1} parent=11 // pred_check_branch
        %136 = sbr.rel (%p134) target = $region16
      $region15: #{layernorm_nchw.1} parent=11 // pred_region
        _
      $region16: #{layernorm_nchw.1} parent=11 // pred_fallthru
        _
      // Predicated region
      $region17: #{layernorm_nchw.1} parent=11 // pred_check
        %p137 = pneg %p91
      $region18: #{layernorm_nchw.1} parent=11 // pred_check_branch
        %139 = sbr.rel (%p137) target = $region20
      $region19: #{layernorm_nchw.1} parent=11 // pred_region
        _
      $region20: #{layernorm_nchw.1} parent=11 // pred_fallthru
        _
    $region12: #{layernorm_nchw.1} parent=5 // pred_fallthru
      _
    %p140 = scmp.lt.s32.totalorder %s9, 4
    // Predicated region
    $region21: #{layernorm_nchw.1} parent=5 // pred_check
      %p141 = pneg %p140
    $region22: #{layernorm_nchw.1} parent=5 // pred_check_branch
      %143 = sbr.rel (%p141) target = $region24
    $region23: #{layernorm_nchw.1} parent=5 // pred_region
      // Predicated region
      $region25: #{layernorm_nchw.1} parent=23 // pred_check
        %p144 = pneg %p43
      $region26: #{layernorm_nchw.1} parent=23 // pred_check_branch
        %146 = sbr.rel (%p144) target = $region28
      $region27: #{layernorm_nchw.1} parent=23 // pred_region
        %p147 = scmp.lt.s32.totalorder %s16, 1
        %s148 = scalar_select %p147, %s16, 1
        %p149 = scmp.lt.s32.totalorder %s17, 1
        %s150 = scalar_select %p149, %s17, 1
        %s151 = smul.addr %s148, 2
        %s152 = sadd.s32 %s150, %s151
        %s153 = smul.addr %s152, 4
        %s154 = scalar_lea.vmem %s0, %s153
      $region28: #{layernorm_nchw.1} parent=23 // pred_fallthru
        _
    $region24: #{layernorm_nchw.1} parent=5 // pred_fallthru
      _
    %p155 = scmp.le.s32.totalorder 1, %s9
    %p156 = scmp.lt.s32.totalorder %s9, 5
    %p157 = pnand %p155, %p156
    %p158 = pneg %p157
    // Predicated region
    $region29: #{layernorm_nchw.1} parent=5 // pred_check
      _
    $region30: #{layernorm_nchw.1} parent=5 // pred_check_branch
      %160 = sbr.rel (%p157) target = $region32
    $region31: #{layernorm_nchw.1} parent=5 // pred_region
      %s161 = ssub.s32 %s9, 1
      %p162 = scmp.lt.s32.totalorder %s18, 1
      %s163 = scalar_select %p162, %s18, 1
      %p164 = scmp.lt.s32.totalorder %s19, 1
      %s165 = scalar_select %p164, %s19, 1
      %s166 = smul.addr %s163, 2
      %s167 = sadd.s32 %s165, %s166
      %s168 = smul.addr %s167, 4
      %s169 = scalar_lea.vmem %s0, %s168
      %p170 = pneg %p49
      %p171 = pneg %p46
      %p172 = pneg %p70
      %p173 = pneg %p67
      %p174 = pneg %p91
      %p175 = pneg %p88
      %p176 = pneg %p119
      %p177 = pneg %p116
      %p178 = scmp.lt.s32.totalorder %s18, 1
      %s179 = scalar_select %p178, %s18, 1
      %p180 = scmp.lt.s32.totalorder %s19, 1
      %s181 = scalar_select %p180, %s19, 1
      %s182 = smul.addr %s179, 2
      %s183 = sadd.s32 %s181, %s182
      %s184 = smul.addr %s183, 4
      %s185 = scalar_lea.vmem %s3, %s184
      %p186 = scmp.lt.s32.totalorder %s18, 1
      %s187 = scalar_select %p186, %s18, 1
      %p188 = scmp.lt.s32.totalorder %s19, 1
      %s189 = scalar_select %p188, %s19, 1
      %s190 = smul.addr %s187, 2
      %s191 = sadd.s32 %s189, %s190
      %s192 = smul.addr %s191, 4
      %s193 = scalar_lea.vmem %s0, %s192
      %p194 = scmp.lt.s32.totalorder %s18, 1
      %s195 = scalar_select %p194, %s18, 1
      %p196 = scmp.lt.s32.totalorder %s19, 1
      %s197 = scalar_select %p196, %s19, 1
      %s198 = smul.addr %s195, 2
      %s199 = sadd.s32 %s197, %s198
      %s200 = smul.addr %s199, 4
      %s201 = scalar_lea.vmem %s3, %s200
      %v202 = vld [vmem:[%s193] sm:$0xf]
      %vm203 = vcmask 1043456
      %v204 = vsel %vm203, %v202, 0.0
      %v205 = vrot.slane %v204, 4
      %v206 = vadd.f32 %v204, %v205
      %v207 = vrot.slane %v206, 2
      %v208 = vadd.f32 %v206, %v207
      %v209 = vrot.slane %v208, 1
      %v210 = vadd.f32 %v208, %v209
      %v211 = vrcp.pop 4.0
      %v212 = vmul.f32 4.0, %v211
      %v213 = vsub.f32 1.0, %v212
      %v214 = vmul.f32 %v211, %v213
      %v215 = vadd.f32 %v211, %v214
      %vm216 = vweird.f32 %v211
      %v217 = vsel %vm216, %v211, %v215
      %v218 = vmul.f32 %v210, %v217
      %v219 = vsub.f32 %v202, %v218
      %v220 = vmul.f32 %v219, %v219
      %v221 = vsel %vm203, %v220, 0.0
      %v222 = vrot.slane %v221, 4
      %v223 = vadd.f32 %v221, %v222
      %v224 = vrot.slane %v223, 2
      %v225 = vadd.f32 %v223, %v224
      %v226 = vrot.slane %v225, 1
      %v227 = vadd.f32 %v225, %v226
      %v228 = vmul.f32 %v227, %v217
      %v229 = vadd.f32 %v228, 1e-05
      %v230 = vrsqrt.pop %v229
      %v231 = vmul.f32 %v230, %v229
      %v232 = vmul.f32 %v231, %v230
      %v233 = vmul.f32 0.5, %v232
      %v234 = vsub.f32 1.5, %v233
      %v235 = vmul.f32 %v230, %v234
      %vm236 = vweird.f32 %v229
      %vm237 = vweird.f32 %v230
      %vm238 = vmor %vm236, %vm237
      %v239 = vsel %vm238, %v230, %v235
      %v240 = vld [vmem:[%s1] sm:$0xf]
      %v241 = vld [vmem:[%s2] sm:$0xf]
      %v242 = vmul.f32 %v219, %v239
      %244 = vset.pattern.permute.xlu0 0
      %245 = vperm.xlu0 %244, %v240
      %v246 = vpop.permute.xlu0 %245
      %v248 = vmul.f32 %v242, %v246
      %250 = vset.pattern.permute.xlu0 0
      %251 = vperm.xlu0 %250, %v241
      %v252 = vpop.permute.xlu0 %251
      %v254 = vadd.f32 %v248, %v252
      %255 = vst [vmem:[%s201] sm:$0xf] %v254
      %p256 = scmp.lt.s32.totalorder %s18, 1
      %s257 = scalar_select %p256, %s18, 1
      %p258 = scmp.lt.s32.totalorder %s19, 1
      %s259 = scalar_select %p258, %s19, 1
      %s260 = smul.addr %s257, 2
      %s261 = sadd.s32 %s259, %s260
      %s262 = smul.addr %s261, 4
      %s263 = scalar_lea.vmem %s3, %s262
      // Predicated region
      $region33: #{layernorm_nchw.1} parent=31 // pred_check
        %p264 = pneg %p116
      $region34: #{layernorm_nchw.1} parent=31 // pred_check_branch
        %266 = sbr.rel (%p264) target = $region36
      $region35: #{layernorm_nchw.1} parent=31 // pred_region
        _
      $region36: #{layernorm_nchw.1} parent=31 // pred_fallthru
        _
    $region32: #{layernorm_nchw.1} parent=5 // pred_fallthru
      _
    %p267 = scmp.le.s32.totalorder 2, %s9
    // Predicated region
    $region37: #{layernorm_nchw.1} parent=5 // pred_check
      %p268 = pneg %p267
    $region38: #{layernorm_nchw.1} parent=5 // pred_check_branch
      %270 = sbr.rel (%p268) target = $region40
    $region39: #{layernorm_nchw.1} parent=5 // pred_region
      %s271 = ssub.s32 %s9, 2
      // Predicated region
      $region41: #{layernorm_nchw.1} parent=39 // pred_check
        %p272 = pneg %p122
      $region42: #{layernorm_nchw.1} parent=39 // pred_check_branch
        %274 = sbr.rel (%p272) target = $region44
      $region43: #{layernorm_nchw.1} parent=39 // pred_region
        %p275 = scmp.lt.s32.totalorder %s20, 1
        %s276 = scalar_select %p275, %s20, 1
        %p277 = scmp.lt.s32.totalorder %s21, 1
        %s278 = scalar_select %p277, %s21, 1
        %s279 = smul.addr %s276, 2
        %s280 = sadd.s32 %s278, %s279
        %s281 = smul.addr %s280, 4
        %s282 = scalar_lea.vmem %s3, %s281
      $region44: #{layernorm_nchw.1} parent=39 // pred_fallthru
        _
    $region40: #{layernorm_nchw.1} parent=5 // pred_fallthru
      _
  $region6: #{layernorm_nchw.1} parent=0 // loop_footer
    %s13 = sadd.s32 1, %s9
  $region7: #{layernorm_nchw.1} parent=0 // loop_footer_branch
    %8 = sbr.rel target = $region3
  $region8: #{layernorm_nchw.1} parent=0 // loop_exit
    _

</llo_original>
